<compile_context>
chip_gen: v7x
topology: tpu7x:2x2x1
jax: 0.10.0
libtpu: 0.0.40
codegen_flags: <defaults>
</compile_context>

<pallas_src>
import jax
import jax.numpy as jnp
from jax.experimental import pallas as pl
from jax.experimental.pallas import tpu as pltpu


def _round_up(x, m):
    return (x + m - 1) // m * m


def cnn_text_kernel(xcol_ref, w_ref, b_ref, mask_ref, wfc_ref, bfc_ref, out_ref):
    """Fused Kim-CNN forward for one batch tile.

    xcol_ref : (Nb, L_out, KD_PAD)   bf16 lane-dense im2col (taps stacked on lanes)
    w_ref    : (KD_PAD, CO_PAD)      bf16 fused conv weights (all branches stacked)
    b_ref    : (1, CO_PAD)           f32  fused conv bias
    mask_ref : (L_out, CO_PAD)       bf16 1/0 validity mask (per-branch valid range)
    wfc_ref  : (CO_PAD, C_PAD)       bf16 zero-padded FC weight
    bfc_ref  : (1, C_PAD)            f32  zero-padded FC bias
    out_ref  : (Nb, C_PAD)           f32  logits (padded lanes are zero-ish, sliced
                                          away in the wrapper)
    """
    nb, l_out, kd_pad = xcol_ref.shape
    co_pad = w_ref.shape[1]

    # Single MXU matmul covering every tap of every conv branch (lane-dense,
    # 256-deep contraction -> full MXU passes).  Reshape only merges leading
    # dims (last dim is a multiple of 128, l_out a multiple of 8): no relayout.
    xcol = xcol_ref[...].reshape(nb * l_out, kd_pad)
    acc = jnp.dot(xcol, w_ref[...], preferred_element_type=jnp.float32)
    acc = acc.reshape(nb, l_out, co_pad) + b_ref[...][None, :, :]

    # ReLU, then zero positions outside each branch's valid time range (and the
    # L_out padding rows); valid ReLU outputs are >= 0 so the time-max is
    # unaffected by the zeros.
    acc = jnp.maximum(acc, 0.0) * mask_ref[...].astype(jnp.float32)[None, :, :]
    feat = jnp.max(acc, axis=1)                       # (Nb, CO_PAD)

    # TODO(synk): dropout is identity here (inference mode); no RNG mask applied.
    logits = jnp.dot(feat.astype(jnp.bfloat16), wfc_ref[...],
                     preferred_element_type=jnp.float32) + bfc_ref[...]
    out_ref[...] = logits.astype(out_ref.dtype)


def cnn_text_forward(x_emb, conv_weights, conv_biases, wfc, bfc, num_classes,
                     *, batch_tile=128, vmem_limit_bytes=48 * 1024 * 1024):
    """conv_weights[j]: (K_j, D, Co), conv_biases[j]: (1, Co), wfc: (len(Ks)*Co, C)."""
    n, seq_len, d = x_emb.shape
    ks = tuple(int(w.shape[0]) for w in conv_weights)
    co = int(conv_weights[0].shape[2])
    n_branch = len(ks)
    k_max = max(ks)
    assert seq_len >= k_max, "seq_len must be >= max kernel size (PyTorch conv would fail)"

    kd = k_max * d
    kd_pad = _round_up(kd, 256)                       # MXU-depth-aligned contraction
    co_pad = _round_up(n_branch * co, 128)            # lane-dense conv channels
    c_pad = _round_up(num_classes, 128)               # lane-dense logits
    l_out = _round_up(seq_len, 8)                     # sublane-aligned time extent

    nb = min(_round_up(batch_tile, 8), _round_up(n, 8))
    n_pad = _round_up(n, nb)

    # ---- plain-JAX input / parameter packing (done once, outside the kernel) ----
    # Lane-dense im2col: xcol[n, t, k*D:(k+1)*D] = x_emb[n, t+k, :], zero elsewhere.
    x_pad = jnp.zeros((n_pad, l_out + k_max - 1, d), jnp.float32)
    x_pad = x_pad.at[:n, :seq_len, :].set(x_emb)
    xcol = jnp.concatenate([x_pad[:, k:k + l_out, :] for k in range(k_max)], axis=-1)
    xcol = jnp.pad(xcol, ((0, 0), (0, 0), (0, kd_pad - kd))).astype(jnp.bfloat16)

    w_fused = jnp.zeros((kd_pad, co_pad), jnp.float32)
    b_fused = jnp.zeros((1, co_pad), jnp.float32)
    for j, (w, b) in enumerate(zip(conv_weights, conv_biases)):
        kj = int(w.shape[0])
        w_fused = w_fused.at[:kj * d, j * co:(j + 1) * co].set(w.reshape(kj * d, co))
        b_fused = b_fused.at[:, j * co:(j + 1) * co].set(b)
    w_fused = w_fused.astype(jnp.bfloat16)

    t = jnp.arange(l_out, dtype=jnp.int32)[:, None]
    mask = jnp.concatenate(
        [jnp.tile((t <= (seq_len - kj)).astype(jnp.float32), (1, co)) for kj in ks],
        axis=1)
    mask = jnp.pad(mask, ((0, 0), (0, co_pad - n_branch * co))).astype(jnp.bfloat16)

    wfc_pad = jnp.zeros((co_pad, c_pad), jnp.float32)
    wfc_pad = wfc_pad.at[:n_branch * co, :num_classes].set(wfc).astype(jnp.bfloat16)
    bfc_pad = jnp.zeros((1, c_pad), jnp.float32).at[:, :num_classes].set(bfc)

    grid = (n_pad // nb,)
    cost = pl.CostEstimate(
        flops=2 * n_pad * l_out * kd_pad * co_pad + 2 * n_pad * co_pad * c_pad,
        transcendentals=0,
        bytes_accessed=(xcol.size + w_fused.size + mask.size + wfc_pad.size) * 2
        + (b_fused.size + bfc_pad.size + n_pad * c_pad) * 4)

    out = pl.pallas_call(
        cnn_text_kernel,
        out_shape=jax.ShapeDtypeStruct((n_pad, c_pad), jnp.float32),
        grid=grid,
        in_specs=[
            pl.BlockSpec((nb, l_out, kd_pad), lambda i: (i, 0, 0)),   # batch-tiled im2col
            pl.BlockSpec((kd_pad, co_pad), lambda i: (0, 0)),         # broadcast weights
            pl.BlockSpec((1, co_pad), lambda i: (0, 0)),
            pl.BlockSpec((l_out, co_pad), lambda i: (0, 0)),
            pl.BlockSpec((co_pad, c_pad), lambda i: (0, 0)),
            pl.BlockSpec((1, c_pad), lambda i: (0, 0)),
        ],
        out_specs=pl.BlockSpec((nb, c_pad), lambda i: (i, 0)),
        compiler_params=pltpu.CompilerParams(
            dimension_semantics=("parallel",),
            vmem_limit_bytes=vmem_limit_bytes),
        cost_estimate=cost,
    )(xcol, w_fused, b_fused, mask, wfc_pad, bfc_pad)

    return out[:n, :num_classes]


def reference_forward(x_emb, conv_weights, conv_biases, wfc, bfc):
    """Pure-JAX reference mirroring the PyTorch forward (dropout = identity).

    Uses bf16 matmul operands / f32 accumulation like the kernel so the
    comparison is apples-to-apples."""
    xb = x_emb.astype(jnp.bfloat16)
    feats = []
    for w, b in zip(conv_weights, conv_biases):
        wb = w.astype(jnp.bfloat16)
        k_size = w.shape[0]
        l_out = x_emb.shape[1] - k_size + 1
        acc = jnp.zeros((x_emb.shape[0], l_out, w.shape[2]), jnp.float32)
        for k in range(k_size):
            acc = acc + jnp.einsum('nld,dc->nlc', xb[:, k:k + l_out, :], wb[k],
                                   preferred_element_type=jnp.float32)
        acc = jax.nn.relu(acc + b[None, :, :])
        feats.append(jnp.max(acc, axis=1))
    feat = jnp.concatenate(feats, axis=1)
    return jnp.dot(feat.astype(jnp.bfloat16), wfc.astype(jnp.bfloat16),
                   preferred_element_type=jnp.float32) + bfc


if __name__ == "__main__":
    # Small, forward-consistent config (mirrors args.* of the PyTorch module).
    V = 50            # embed_num
    D = 32            # embed_dim
    C = 4             # class_num
    Co = 8            # kernel_num
    Ks = (3, 4, 5)    # kernel_sizes
    N = 2             # batch
    L = 16            # sequence length

    key = jax.random.PRNGKey(0)
    keys = jax.random.split(key, 12)

    # Deterministic synthetic parameters (shapes from nn.Embedding / Conv2d / Linear).
    embed_table = jax.random.normal(keys[0], (V, D), jnp.float32) * 0.1

    conv_weights = []   # stored as (K, D, Co)  == Conv2d weight (Co,1,K,D) transposed
    conv_biases = []    # stored as (1, Co)
    for i, K in enumerate(Ks):
        w_torch = jax.random.normal(keys[1 + i], (Co, 1, K, D), jnp.float32) * 0.1
        b = jax.random.normal(keys[4 + i], (Co,), jnp.float32) * 0.1
        conv_weights.append(jnp.transpose(w_torch[:, 0, :, :], (1, 2, 0)))  # (K, D, Co)
        conv_biases.append(b.reshape(1, Co))

    w_fc_torch = jax.random.normal(keys[7], (C, len(Ks) * Co), jnp.float32) * 0.1
    b_fc = jax.random.normal(keys[8], (C,), jnp.float32) * 0.1
    wfc = w_fc_torch.T                 # (len(Ks)*Co, C)
    bfc = b_fc.reshape(1, C)           # (1, C)

    # Input token ids and embedding lookup (gather = glue, outside the kernel).
    x_ids = jax.random.randint(keys[9], (N, L), 0, V, jnp.int32)
    x_emb = embed_table[x_ids]         # (N, L, D)

    logits = cnn_text_forward(x_emb, conv_weights, conv_biases, wfc, bfc, C)
    logits = jax.block_until_ready(logits)

    ref = reference_forward(x_emb, conv_weights, conv_biases, wfc, bfc)
    assert logits.shape == (N, C)
    assert jnp.allclose(logits, ref, atol=2e-3, rtol=2e-3), "mismatch vs JAX reference"

    print("KERNEL_OK")
</pallas_src>

<mosaic_0001>
module attributes {stable_mosaic.version = 11 : i64} {
  func.func @cnn_text_kernel(%arg0: i32, %arg1: memref<8x16x256xbf16, #tpu.memory_space<vmem>>, %arg2: memref<256x128xbf16, #tpu.memory_space<vmem>>, %arg3: memref<1x128xf32, #tpu.memory_space<vmem>>, %arg4: memref<16x128xbf16, #tpu.memory_space<vmem>>, %arg5: memref<128x128xbf16, #tpu.memory_space<vmem>>, %arg6: memref<1x128xf32, #tpu.memory_space<vmem>>, %arg7: memref<8x128xf32, #tpu.memory_space<vmem>>) attributes {dimension_semantics = [#tpu.dimension_semantics<parallel>], iteration_bounds = array<i64: 1>, scalar_prefetch = 0 : i64, scratch_operands = 0 : i64, tpu.core_type = #tpu.core_type<tc>, window_params = [{transform_indices = @transform_0, window_bounds = array<i64: 8, 16, 256>}, {pipeline_mode = #tpu.pipeline_mode<synchronous>, transform_indices = @transform_1, window_bounds = array<i64: 256, 128>}, {pipeline_mode = #tpu.pipeline_mode<synchronous>, transform_indices = @transform_2, window_bounds = array<i64: 1, 128>}, {pipeline_mode = #tpu.pipeline_mode<synchronous>, transform_indices = @transform_3, window_bounds = array<i64: 16, 128>}, {pipeline_mode = #tpu.pipeline_mode<synchronous>, transform_indices = @transform_4, window_bounds = array<i64: 128, 128>}, {pipeline_mode = #tpu.pipeline_mode<synchronous>, transform_indices = @transform_5, window_bounds = array<i64: 1, 128>}, {transform_indices = @transform_6, window_bounds = array<i64: 8, 128>}]} {
    %c0 = arith.constant 0 : index
    %c0_0 = arith.constant 0 : index
    %c0_1 = arith.constant 0 : index
    %0 = vector.load %arg1[%c0, %c0_0, %c0_1] : memref<8x16x256xbf16, #tpu.memory_space<vmem>>, vector<8x16x256xbf16>
    %1 = vector.shape_cast %0 : vector<8x16x256xbf16> to vector<128x256xbf16>
    %c0_2 = arith.constant 0 : index
    %c0_3 = arith.constant 0 : index
    %2 = vector.load %arg2[%c0_2, %c0_3] : memref<256x128xbf16, #tpu.memory_space<vmem>>, vector<256x128xbf16>
    %cst = arith.constant dense<0.000000e+00> : vector<128x128xf32>
    %3 = tpu.matmul %1, %2, %cst {dimension_numbers = #tpu.dot_dimension_numbers<[1], [0], [0], [1], [0, 0, 1, 1], [], []>} : vector<128x256xbf16>, vector<256x128xbf16>, vector<128x128xf32> -> vector<128x128xf32>
    %4 = vector.shape_cast %3 : vector<128x128xf32> to vector<8x16x128xf32>
    %c0_4 = arith.constant 0 : index
    %c0_5 = arith.constant 0 : index
    %5 = vector.load %arg3[%c0_4, %c0_5] : memref<1x128xf32, #tpu.memory_space<vmem>>, vector<1x128xf32>
    %6 = vector.shape_cast %5 : vector<1x128xf32> to vector<1x1x128xf32>
    %7 = vector.broadcast %6 : vector<1x1x128xf32> to vector<8x16x128xf32>
    %8 = arith.addf %4, %7 : vector<8x16x128xf32>
    %cst_6 = arith.constant 0.000000e+00 : f32
    %9 = vector.broadcast %cst_6 : f32 to vector<8x16x128xf32>
    %10 = arith.maximumf %8, %9 : vector<8x16x128xf32>
    %c0_7 = arith.constant 0 : index
    %c0_8 = arith.constant 0 : index
    %11 = vector.load %arg4[%c0_7, %c0_8] : memref<16x128xbf16, #tpu.memory_space<vmem>>, vector<16x128xbf16>
    %12 = arith.extf %11 : vector<16x128xbf16> to vector<16x128xf32>
    %13 = vector.shape_cast %12 : vector<16x128xf32> to vector<1x16x128xf32>
    %14 = vector.broadcast %13 : vector<1x16x128xf32> to vector<8x16x128xf32>
    %15 = arith.mulf %10, %14 : vector<8x16x128xf32>
    %cst_9 = arith.constant dense<0xFF800000> : vector<8x128xf32>
    %16 = vector.multi_reduction <maximumf>, %15, %cst_9 [1] : vector<8x16x128xf32> to vector<8x128xf32>
    %17 = arith.truncf %16 : vector<8x128xf32> to vector<8x128xbf16>
    %c0_10 = arith.constant 0 : index
    %c0_11 = arith.constant 0 : index
    %18 = vector.load %arg5[%c0_10, %c0_11] : memref<128x128xbf16, #tpu.memory_space<vmem>>, vector<128x128xbf16>
    %cst_12 = arith.constant dense<0.000000e+00> : vector<8x128xf32>
    %19 = tpu.matmul %17, %18, %cst_12 {dimension_numbers = #tpu.dot_dimension_numbers<[1], [0], [0], [1], [0, 0, 1, 1], [], []>} : vector<8x128xbf16>, vector<128x128xbf16>, vector<8x128xf32> -> vector<8x128xf32>
    %c0_13 = arith.constant 0 : index
    %c0_14 = arith.constant 0 : index
    %20 = vector.load %arg6[%c0_13, %c0_14] : memref<1x128xf32, #tpu.memory_space<vmem>>, vector<1x128xf32>
    %21 = vector.broadcast %20 : vector<1x128xf32> to vector<8x128xf32>
    %22 = arith.addf %19, %21 : vector<8x128xf32>
    %c0_15 = arith.constant 0 : index
    %c0_16 = arith.constant 0 : index
    %23 = vector.load %arg7[%c0_15, %c0_16] : memref<8x128xf32, #tpu.memory_space<vmem>>, vector<8x128xf32>
    tpu.vector_store %arg7[%c0_15, %c0_16], %22 {strides = array<i32>} : memref<8x128xf32, #tpu.memory_space<vmem>>, vector<8x128xf32>,
    return
  }
  func.func @transform_0(%arg0: i32) -> (i32, i32, i32) {
    %c0_i32 = arith.constant 0 : i32
    %c0_i32_0 = arith.constant 0 : i32
    %c0_i32_1 = arith.constant 0 : i32
    return %arg0, %c0_i32, %c0_i32_0 : i32, i32, i32
  }
  func.func @transform_1(%arg0: i32) -> (i32, i32) {
    %c0_i32 = arith.constant 0 : i32
    %c0_i32_0 = arith.constant 0 : i32
    %c0_i32_1 = arith.constant 0 : i32
    return %c0_i32, %c0_i32_0 : i32, i32
  }
  func.func @transform_2(%arg0: i32) -> (i32, i32) {
    %c0_i32 = arith.constant 0 : i32
    %c0_i32_0 = arith.constant 0 : i32
    %c0_i32_1 = arith.constant 0 : i32
    return %c0_i32, %c0_i32_0 : i32, i32
  }
  func.func @transform_3(%arg0: i32) -> (i32, i32) {
    %c0_i32 = arith.constant 0 : i32
    %c0_i32_0 = arith.constant 0 : i32
    %c0_i32_1 = arith.constant 0 : i32
    return %c0_i32, %c0_i32_0 : i32, i32
  }
  func.func @transform_4(%arg0: i32) -> (i32, i32) {
    %c0_i32 = arith.constant 0 : i32
    %c0_i32_0 = arith.constant 0 : i32
    %c0_i32_1 = arith.constant 0 : i32
    return %c0_i32, %c0_i32_0 : i32, i32
  }
  func.func @transform_5(%arg0: i32) -> (i32, i32) {
    %c0_i32 = arith.constant 0 : i32
    %c0_i32_0 = arith.constant 0 : i32
    %c0_i32_1 = arith.constant 0 : i32
    return %c0_i32, %c0_i32_0 : i32, i32
  }
  func.func @transform_6(%arg0: i32) -> (i32, i32) {
    %c0_i32 = arith.constant 0 : i32
    %c0_i32_0 = arith.constant 0 : i32
    return %arg0, %c0_i32 : i32, i32
  }
}

</mosaic_0001>

<llo_original>
// kernel: tpu_custom_call.1
$region0: #{tpu_custom_call.1}
  #allocation0 [shape = 'u32[]', space=smem, size = 0x4, offset = 0x4, fixed_abs, tag = 'smem constant byte address 0x4 - core index']
  #allocation1 [shape = 'u32[144,128]{1,0:T(1,128)}', space=vmem, size = 0x12000, scoped, tag = 'internal scratch']
  %s0 = inlined_call_operand.hbm [shape: bf16[8,16,256], index: 0, kind: input, shape index: {}]
  %s1 = inlined_call_operand.hbm [shape: bf16[256,128], index: 1, kind: input, shape index: {}]
  %s2 = inlined_call_operand.vmem [shape: f32[1,128], index: 2, kind: input, shape index: {}]
  %s3 = inlined_call_operand.vmem [shape: bf16[16,128], index: 3, kind: input, shape index: {}]
  %s4 = inlined_call_operand.hbm [shape: bf16[128,128], index: 4, kind: input, shape index: {}]
  %s5 = inlined_call_operand.vmem [shape: f32[1,128], index: 5, kind: input, shape index: {}]
  %s6 = inlined_call_operand.hbm [shape: f32[8,128], index: 6, kind: output, shape index: {}]
  %s7 = sld [smem:[#allocation0]]
  $region46: #{tpu_custom_call.1} parent=0
    _
  %s9 = ssub.s32 1, %s7
  %s10 = scalar_select 0, %s9, %s7
  $region1: #{tpu_custom_call.1} parent=0
    #allocation2 [shape = 'u8[65536]{0}', space=vmem, size = 0x10000, scoped, tag = 'input window, operand 0, single buffered']
    #allocation3 [shape = 's32[1]{0}', space=sflag, size = 0x4, scoped, tag = 'scoped memory for tpu_custom_call.1']
    #allocation4 [shape = 's32[1]{0}', space=sflag, size = 0x4, scoped, tag = 'scoped memory for tpu_custom_call.1']
    #allocation5 [shape = 'u8[65536]{0}', space=vmem, size = 0x10000, scoped, tag = 'input window, operand 1, single buffered']
    #allocation6 [shape = 's32[1]{0}', space=sflag, size = 0x4, scoped, tag = 'scoped memory for tpu_custom_call.1']
    #allocation7 [shape = 'u8[32768]{0}', space=vmem, size = 0x8000, scoped, tag = 'input window, operand 4, single buffered']
    #allocation8 [shape = 'u8[4096]{0}', space=vmem, size = 0x1000, scoped, tag = 'output window, operand 0, single buffered']
    %11 = vsyncpa [#allocation3], 0
    %12 = vsyncpa [#allocation6], 0
    %13 = vsyncpa [#allocation4], 0
    // Predicated region
    $region2: #{tpu_custom_call.1} parent=1 // pred_check
      _
    $region3: #{tpu_custom_call.1} parent=1 // pred_check_branch
      %15 = sbr.rel (0) target = $region5
    $region4: #{tpu_custom_call.1} parent=1 // pred_region
      %s17 = ssub.s32 2048, 2048
      %18 = vsyncadd [#allocation3], %s17
      %s19 = sshll.u32 [#allocation2], 4
      %s20 = int_to_ptr.vmem [resolvable:$true] %s19
      %25 = dma.hbm_to_vmem [thread:$0]  %s0, 2048, %s20, [#allocation3], 128, 128, 8
    $region5: #{tpu_custom_call.1} parent=1 // pred_fallthru
      _
    // Predicated region
    $region6: #{tpu_custom_call.1} parent=1 // pred_check
      _
    $region7: #{tpu_custom_call.1} parent=1 // pred_check_branch
      %27 = sbr.rel (0) target = $region9
    $region8: #{tpu_custom_call.1} parent=1 // pred_region
      %s29 = ssub.s32 2048, 2048
      %30 = vsyncadd [#allocation6], %s29
      %s31 = sshll.u32 [#allocation5], 4
      %s32 = int_to_ptr.vmem [resolvable:$true] %s31
      %37 = dma.hbm_to_vmem [thread:$0]  %s1, 2048, %s32, [#allocation6], 64, 64, 4
    $region9: #{tpu_custom_call.1} parent=1 // pred_fallthru
      _
    // Predicated region
    $region10: #{tpu_custom_call.1} parent=1 // pred_check
      _
    $region11: #{tpu_custom_call.1} parent=1 // pred_check_branch
      %39 = sbr.rel (0) target = $region13
    $region12: #{tpu_custom_call.1} parent=1 // pred_region
      _
    $region13: #{tpu_custom_call.1} parent=1 // pred_fallthru
      _
    // Predicated region
    $region14: #{tpu_custom_call.1} parent=1 // pred_check
      _
    $region15: #{tpu_custom_call.1} parent=1 // pred_check_branch
      %41 = sbr.rel (0) target = $region17
    $region16: #{tpu_custom_call.1} parent=1 // pred_region
      _
    $region17: #{tpu_custom_call.1} parent=1 // pred_fallthru
      _
    // Predicated region
    $region18: #{tpu_custom_call.1} parent=1 // pred_check
      _
    $region19: #{tpu_custom_call.1} parent=1 // pred_check_branch
      %43 = sbr.rel (0) target = $region21
    $region20: #{tpu_custom_call.1} parent=1 // pred_region
      %s45 = ssub.s32 1024, 1024
      %46 = vsyncadd [#allocation6], %s45
      %s47 = sshll.u32 [#allocation7], 4
      %s48 = int_to_ptr.vmem [resolvable:$true] %s47
      %53 = dma.hbm_to_vmem [thread:$0]  %s4, 1024, %s48, [#allocation6], 64, 64, 4
    $region21: #{tpu_custom_call.1} parent=1 // pred_fallthru
      _
    // Predicated region
    $region22: #{tpu_custom_call.1} parent=1 // pred_check
      _
    $region23: #{tpu_custom_call.1} parent=1 // pred_check_branch
      %55 = sbr.rel (0) target = $region25
    $region24: #{tpu_custom_call.1} parent=1 // pred_region
      _
    $region25: #{tpu_custom_call.1} parent=1 // pred_fallthru
      _
    // Predicated region
    $region26: #{tpu_custom_call.1} parent=1 // pred_check
      _
    $region27: #{tpu_custom_call.1} parent=1 // pred_check_branch
      %57 = sbr.rel (0) target = $region29
    $region28: #{tpu_custom_call.1} parent=1 // pred_region
      %58 = dma.done [#allocation3], 2048
    $region29: #{tpu_custom_call.1} parent=1 // pred_fallthru
      _
    // Predicated region
    $region30: #{tpu_custom_call.1} parent=1 // pred_check
      _
    $region31: #{tpu_custom_call.1} parent=1 // pred_check_branch
      %60 = sbr.rel (0) target = $region33
    $region32: #{tpu_custom_call.1} parent=1 // pred_region
      %61 = dma.done [#allocation6], 2048
    $region33: #{tpu_custom_call.1} parent=1 // pred_fallthru
      _
    // Predicated region
    $region34: #{tpu_custom_call.1} parent=1 // pred_check
      _
    $region35: #{tpu_custom_call.1} parent=1 // pred_check_branch
      %63 = sbr.rel (0) target = $region37
    $region36: #{tpu_custom_call.1} parent=1 // pred_region
      %64 = dma.done [#allocation6], 1024
    $region37: #{tpu_custom_call.1} parent=1 // pred_fallthru
      _
    %v66 = vld [vmem:[#allocation2] sm:$0xff]
    %v67 = vld [vmem:[#allocation2 + $0x8] sm:$0xff]
    %v68 = vld [vmem:[#allocation2 + $0x10] sm:$0xff]
    %v69 = vld [vmem:[#allocation2 + $0x18] sm:$0xff]
    %v70 = vld [vmem:[#allocation2 + $0x20] sm:$0xff]
    %v71 = vld [vmem:[#allocation2 + $0x28] sm:$0xff]
    %v72 = vld [vmem:[#allocation2 + $0x30] sm:$0xff]
    %v73 = vld [vmem:[#allocation2 + $0x38] sm:$0xff]
    %v74 = vld [vmem:[#allocation2 + $0x40] sm:$0xff]
    %v75 = vld [vmem:[#allocation2 + $0x48] sm:$0xff]
    %v76 = vld [vmem:[#allocation2 + $0x50] sm:$0xff]
    %v77 = vld [vmem:[#allocation2 + $0x58] sm:$0xff]
    %v78 = vld [vmem:[#allocation2 + $0x60] sm:$0xff]
    %v79 = vld [vmem:[#allocation2 + $0x68] sm:$0xff]
    %v80 = vld [vmem:[#allocation2 + $0x70] sm:$0xff]
    %v81 = vld [vmem:[#allocation2 + $0x78] sm:$0xff]
    %v82 = vld [vmem:[#allocation5] sm:$0xf]
    %v83 = vld [vmem:[#allocation5 + $0x4] sm:$0xf]
    %v84 = vld [vmem:[#allocation5 + $0x8] sm:$0xf]
    %v85 = vld [vmem:[#allocation5 + $0xc] sm:$0xf]
    %v86 = vld [vmem:[#allocation5 + $0x10] sm:$0xf]
    %v87 = vld [vmem:[#allocation5 + $0x14] sm:$0xf]
    %v88 = vld [vmem:[#allocation5 + $0x18] sm:$0xf]
    %v89 = vld [vmem:[#allocation5 + $0x1c] sm:$0xf]
    %v90 = vld [vmem:[#allocation5 + $0x20] sm:$0xf]
    %v91 = vld [vmem:[#allocation5 + $0x24] sm:$0xf]
    %v92 = vld [vmem:[#allocation5 + $0x28] sm:$0xf]
    %v93 = vld [vmem:[#allocation5 + $0x2c] sm:$0xf]
    %v94 = vld [vmem:[#allocation5 + $0x30] sm:$0xf]
    %v95 = vld [vmem:[#allocation5 + $0x34] sm:$0xf]
    %v96 = vld [vmem:[#allocation5 + $0x38] sm:$0xf]
    %v97 = vld [vmem:[#allocation5 + $0x3c] sm:$0xf]
    %v98 = vld [vmem:[#allocation5 + $0x40] sm:$0xf]
    %v99 = vld [vmem:[#allocation5 + $0x44] sm:$0xf]
    %v100 = vld [vmem:[#allocation5 + $0x48] sm:$0xf]
    %v101 = vld [vmem:[#allocation5 + $0x4c] sm:$0xf]
    %v102 = vld [vmem:[#allocation5 + $0x50] sm:$0xf]
    %v103 = vld [vmem:[#allocation5 + $0x54] sm:$0xf]
    %v104 = vld [vmem:[#allocation5 + $0x58] sm:$0xf]
    %v105 = vld [vmem:[#allocation5 + $0x5c] sm:$0xf]
    %v106 = vld [vmem:[#allocation5 + $0x60] sm:$0xf]
    %v107 = vld [vmem:[#allocation5 + $0x64] sm:$0xf]
    %v108 = vld [vmem:[#allocation5 + $0x68] sm:$0xf]
    %v109 = vld [vmem:[#allocation5 + $0x6c] sm:$0xf]
    %v110 = vld [vmem:[#allocation5 + $0x70] sm:$0xf]
    %v111 = vld [vmem:[#allocation5 + $0x74] sm:$0xf]
    %v112 = vld [vmem:[#allocation5 + $0x78] sm:$0xf]
    %v113 = vld [vmem:[#allocation5 + $0x7c] sm:$0xf]
    %v130 = vunpack.c.l.b16 %v66
    %v131 = vunpack.c.h.b16 %v66
    %v132 = vunpack.c.l.b16 %v67
    %v133 = vunpack.c.h.b16 %v67
    %v134 = vunpack.c.l.b16 %v68
    %v135 = vunpack.c.h.b16 %v68
    %v136 = vunpack.c.l.b16 %v69
    %v137 = vunpack.c.h.b16 %v69
    %v138 = vunpack.c.l.b16 %v70
    %v139 = vunpack.c.h.b16 %v70
    %v140 = vunpack.c.l.b16 %v71
    %v141 = vunpack.c.h.b16 %v71
    %v142 = vunpack.c.l.b16 %v72
    %v143 = vunpack.c.h.b16 %v72
    %v144 = vunpack.c.l.b16 %v73
    %v145 = vunpack.c.h.b16 %v73
    %v146 = vunpack.c.l.b16 %v74
    %v147 = vunpack.c.h.b16 %v74
    %v148 = vunpack.c.l.b16 %v75
    %v149 = vunpack.c.h.b16 %v75
    %v150 = vunpack.c.l.b16 %v76
    %v151 = vunpack.c.h.b16 %v76
    %v152 = vunpack.c.l.b16 %v77
    %v153 = vunpack.c.h.b16 %v77
    %v154 = vunpack.c.l.b16 %v78
    %v155 = vunpack.c.h.b16 %v78
    %v156 = vunpack.c.l.b16 %v79
    %v157 = vunpack.c.h.b16 %v79
    %v158 = vunpack.c.l.b16 %v80
    %v159 = vunpack.c.h.b16 %v80
    %v160 = vunpack.c.l.b16 %v81
    %v161 = vunpack.c.h.b16 %v81
    %v162 = vpack.c.b16 %v132, %v130
    %v163 = vpack.c.b16 %v133, %v131
    %v164 = vpack.c.b16 %v136, %v134
    %v165 = vpack.c.b16 %v137, %v135
    %v166 = vpack.c.b16 %v140, %v138
    %v167 = vpack.c.b16 %v141, %v139
    %v168 = vpack.c.b16 %v144, %v142
    %v169 = vpack.c.b16 %v145, %v143
    %v170 = vpack.c.b16 %v148, %v146
    %v171 = vpack.c.b16 %v149, %v147
    %v172 = vpack.c.b16 %v152, %v150
    %v173 = vpack.c.b16 %v153, %v151
    %v174 = vpack.c.b16 %v156, %v154
    %v175 = vpack.c.b16 %v157, %v155
    %v176 = vpack.c.b16 %v160, %v158
    %v177 = vpack.c.b16 %v161, %v159
    %v226 = vunpack.c.l.b16 %v82
    %v227 = vunpack.c.l.b16 %v83
    %v228 = vunpack.c.l.b16 %v84
    %v229 = vunpack.c.l.b16 %v85
    %v230 = vunpack.c.l.b16 %v86
    %v231 = vunpack.c.l.b16 %v87
    %v232 = vunpack.c.l.b16 %v88
    %v233 = vunpack.c.l.b16 %v89
    %v234 = vunpack.c.l.b16 %v90
    %v235 = vunpack.c.l.b16 %v91
    %v236 = vunpack.c.l.b16 %v92
    %v237 = vunpack.c.l.b16 %v93
    %v238 = vunpack.c.l.b16 %v94
    %v239 = vunpack.c.l.b16 %v95
    %v240 = vunpack.c.l.b16 %v96
    %v241 = vunpack.c.l.b16 %v97
    %v242 = vunpack.c.l.b16 %v98
    %v243 = vunpack.c.l.b16 %v99
    %v244 = vunpack.c.l.b16 %v100
    %v245 = vunpack.c.l.b16 %v101
    %v246 = vunpack.c.l.b16 %v102
    %v247 = vunpack.c.l.b16 %v103
    %v248 = vunpack.c.l.b16 %v104
    %v249 = vunpack.c.l.b16 %v105
    %v250 = vunpack.c.l.b16 %v106
    %v251 = vunpack.c.l.b16 %v107
    %v252 = vunpack.c.l.b16 %v108
    %v253 = vunpack.c.l.b16 %v109
    %v254 = vunpack.c.l.b16 %v110
    %v255 = vunpack.c.l.b16 %v111
    %v256 = vunpack.c.l.b16 %v112
    %v257 = vunpack.c.l.b16 %v113
    %v258 = vpack.c.b16 %v227, %v226
    %v259 = vpack.c.b16 %v229, %v228
    %v260 = vpack.c.b16 %v231, %v230
    %v261 = vpack.c.b16 %v233, %v232
    %v262 = vpack.c.b16 %v235, %v234
    %v263 = vpack.c.b16 %v237, %v236
    %v264 = vpack.c.b16 %v239, %v238
    %v265 = vpack.c.b16 %v241, %v240
    %v266 = vpack.c.b16 %v243, %v242
    %v267 = vpack.c.b16 %v245, %v244
    %v268 = vpack.c.b16 %v247, %v246
    %v269 = vpack.c.b16 %v249, %v248
    %v270 = vpack.c.b16 %v251, %v250
    %v271 = vpack.c.b16 %v253, %v252
    %v272 = vpack.c.b16 %v255, %v254
    %v273 = vpack.c.b16 %v257, %v256
    %290 = vmatprep.subr.bf16.mxu0 0
    %291 = vmatpush1.bf16.msra.mxu0 %v258
    %292 = vmatprep.subr.bf16.mxu0 0
    %293 = vmatpush1.bf16.msra.mxu0 %v259
    %294 = vmatprep.subr.bf16.mxu0 0
    %295 = vmatpush1.bf16.msra.mxu0 %v260
    %296 = vmatprep.subr.bf16.mxu0 0
    %297 = vmatpush1.bf16.msra.mxu0 %v261
    %298 = vmatprep.subr.bf16.mxu0 0
    %299 = vmatpush1.bf16.msra.mxu0 %v262
    %300 = vmatprep.subr.bf16.mxu0 0
    %301 = vmatpush1.bf16.msra.mxu0 %v263
    %302 = vmatprep.subr.bf16.mxu0 0
    %303 = vmatpush1.bf16.msra.mxu0 %v264
    %304 = vmatprep.subr.bf16.mxu0 0
    %305 = vmatpush1.bf16.msra.mxu0 %v265
    %306 = vmatprep.subr.bf16.mxu0 0
    %307 = vmatpush1.bf16.msra.mxu0 %v266
    %308 = vmatprep.subr.bf16.mxu0 0
    %309 = vmatpush1.bf16.msra.mxu0 %v267
    %310 = vmatprep.subr.bf16.mxu0 0
    %311 = vmatpush1.bf16.msra.mxu0 %v268
    %312 = vmatprep.subr.bf16.mxu0 0
    %313 = vmatpush1.bf16.msra.mxu0 %v269
    %314 = vmatprep.subr.bf16.mxu0 0
    %315 = vmatpush1.bf16.msra.mxu0 %v270
    %316 = vmatprep.subr.bf16.mxu0 0
    %317 = vmatpush1.bf16.msra.mxu0 %v271
    %318 = vmatprep.subr.bf16.mxu0 0
    %319 = vmatpush1.bf16.msra.mxu0 %v272
    %320 = vmatprep.subr.bf16.mxu0 0
    %321 = vmatpush1.bf16.msra.mxu0 %v273
    %322 = vmatprep.mubr.bf16.mxu0 %v163
    %323 = vmatmul.mubr.bf16.gmra.mrb[0].mxu0 %v162
    %v324 = vpop.f32.mrb[0].mxu0
    %v325 = vadd.f32 0.0, %v324
    %v326 = vpop.f32.mrb[0].mxu0
    %v327 = vpop.f32.mrb[0].mxu0
    %v328 = vadd.f32 0.0, %v327
    %v329 = vpop.f32.mrb[0].mxu0
    %330 = vmatprep.mubr.bf16.mxu0 %v165
    %331 = vmatmul.mubr.bf16.gmra.mrb[0].mxu0 %v164
    %v332 = vpop.f32.mrb[0].mxu0
    %v333 = vadd.f32 0.0, %v332
    %v334 = vpop.f32.mrb[0].mxu0
    %v335 = vpop.f32.mrb[0].mxu0
    %v336 = vadd.f32 0.0, %v335
    %v337 = vpop.f32.mrb[0].mxu0
    %338 = vmatprep.mubr.bf16.mxu0 %v167
    %339 = vmatmul.mubr.bf16.gmra.mrb[0].mxu0 %v166
    %v340 = vpop.f32.mrb[0].mxu0
    %v341 = vadd.f32 0.0, %v340
    %v342 = vpop.f32.mrb[0].mxu0
    %v343 = vpop.f32.mrb[0].mxu0
    %v344 = vadd.f32 0.0, %v343
    %v345 = vpop.f32.mrb[0].mxu0
    %346 = vmatprep.mubr.bf16.mxu0 %v169
    %347 = vmatmul.mubr.bf16.gmra.mrb[0].mxu0 %v168
    %v348 = vpop.f32.mrb[0].mxu0
    %v349 = vadd.f32 0.0, %v348
    %v350 = vpop.f32.mrb[0].mxu0
    %v351 = vpop.f32.mrb[0].mxu0
    %v352 = vadd.f32 0.0, %v351
    %v353 = vpop.f32.mrb[0].mxu0
    %354 = vmatprep.mubr.bf16.mxu0 %v171
    %355 = vmatmul.mubr.bf16.gmra.mrb[0].mxu0 %v170
    %v356 = vpop.f32.mrb[0].mxu0
    %v357 = vadd.f32 0.0, %v356
    %v358 = vpop.f32.mrb[0].mxu0
    %v359 = vpop.f32.mrb[0].mxu0
    %v360 = vadd.f32 0.0, %v359
    %v361 = vpop.f32.mrb[0].mxu0
    %362 = vmatprep.mubr.bf16.mxu0 %v173
    %363 = vmatmul.mubr.bf16.gmra.mrb[0].mxu0 %v172
    %v364 = vpop.f32.mrb[0].mxu0
    %v365 = vadd.f32 0.0, %v364
    %v366 = vpop.f32.mrb[0].mxu0
    %v367 = vpop.f32.mrb[0].mxu0
    %v368 = vadd.f32 0.0, %v367
    %v369 = vpop.f32.mrb[0].mxu0
    %370 = vmatprep.mubr.bf16.mxu0 %v175
    %371 = vmatmul.mubr.bf16.gmra.mrb[0].mxu0 %v174
    %v372 = vpop.f32.mrb[0].mxu0
    %v373 = vadd.f32 0.0, %v372
    %v374 = vpop.f32.mrb[0].mxu0
    %v375 = vpop.f32.mrb[0].mxu0
    %v376 = vadd.f32 0.0, %v375
    %v377 = vpop.f32.mrb[0].mxu0
    %378 = vmatprep.mubr.bf16.mxu0 %v177
    %379 = vmatmul.mubr.bf16.gmra.mrb[0].mxu0 %v176
    %v380 = vpop.f32.mrb[0].mxu0
    %v381 = vadd.f32 0.0, %v380
    %v382 = vpop.f32.mrb[0].mxu0
    %v383 = vpop.f32.mrb[0].mxu0
    %v384 = vadd.f32 0.0, %v383
    %v385 = vpop.f32.mrb[0].mxu0
    %386 = vdwg.mxu0
    %v387 = vld [vmem:[%s2] sm:$0x1]
    %v389 = vlaneseq
    %v390 = vshrl.u32 %v389, 7
    %v391 = vsub.s32 0, %v390
    %v392 = vrot.slane %v387, %v391
    %v394 = vadd.f32 %v325, %v392
    %v395 = vadd.f32 %v328, %v392
    %v396 = vadd.f32 %v333, %v392
    %v397 = vadd.f32 %v336, %v392
    %v398 = vadd.f32 %v341, %v392
    %v399 = vadd.f32 %v344, %v392
    %v400 = vadd.f32 %v349, %v392
    %v401 = vadd.f32 %v352, %v392
    %v402 = vadd.f32 %v357, %v392
    %v403 = vadd.f32 %v360, %v392
    %v404 = vadd.f32 %v365, %v392
    %v405 = vadd.f32 %v368, %v392
    %v406 = vadd.f32 %v373, %v392
    %v407 = vadd.f32 %v376, %v392
    %v408 = vadd.f32 %v381, %v392
    %v409 = vadd.f32 %v384, %v392
    %v410 = vmax.f32 %v394, 0.0
    %v411 = vmax.f32 %v395, 0.0
    %v412 = vmax.f32 %v396, 0.0
    %v413 = vmax.f32 %v397, 0.0
    %v414 = vmax.f32 %v398, 0.0
    %v415 = vmax.f32 %v399, 0.0
    %v416 = vmax.f32 %v400, 0.0
    %v417 = vmax.f32 %v401, 0.0
    %v418 = vmax.f32 %v402, 0.0
    %v419 = vmax.f32 %v403, 0.0
    %v420 = vmax.f32 %v404, 0.0
    %v421 = vmax.f32 %v405, 0.0
    %v422 = vmax.f32 %v406, 0.0
    %v423 = vmax.f32 %v407, 0.0
    %v424 = vmax.f32 %v408, 0.0
    %v425 = vmax.f32 %v409, 0.0
    %v426 = vld [vmem:[%s3] sm:$0xf]
    %v427 = vld [vmem:[%s3 + $0x4] sm:$0xf]
    %v428 = vunpack.c.l.bf16 %v426
    %v429 = vunpack.c.l.bf16 %v427
    %v430 = vmul.f32 %v410, %v428
    %v431 = vmul.f32 %v411, %v429
    %v432 = vmul.f32 %v412, %v428
    %v433 = vmul.f32 %v413, %v429
    %v434 = vmul.f32 %v414, %v428
    %v435 = vmul.f32 %v415, %v429
    %v436 = vmul.f32 %v416, %v428
    %v437 = vmul.f32 %v417, %v429
    %v438 = vmul.f32 %v418, %v428
    %v439 = vmul.f32 %v419, %v429
    %v440 = vmul.f32 %v420, %v428
    %v441 = vmul.f32 %v421, %v429
    %v442 = vmul.f32 %v422, %v428
    %v443 = vmul.f32 %v423, %v429
    %v444 = vmul.f32 %v424, %v428
    %v445 = vmul.f32 %v425, %v429
    %v446 = vmax.f32 %v430, %v431
    %v447 = vrot.slane %v446, 4
    %v448 = vmax.f32 %v446, %v447
    %v449 = vrot.slane %v448, 2
    %v450 = vmax.f32 %v448, %v449
    %v451 = vrot.slane %v450, 1
    %v452 = vmax.f32 %v450, %v451
    %v453 = vmax.f32 %v432, %v433
    %v454 = vrot.slane %v453, 4
    %v455 = vmax.f32 %v453, %v454
    %v456 = vrot.slane %v455, 2
    %v457 = vmax.f32 %v455, %v456
    %v458 = vrot.slane %v457, 1
    %v459 = vmax.f32 %v457, %v458
    %v460 = vmax.f32 %v434, %v435
    %v461 = vrot.slane %v460, 4
    %v462 = vmax.f32 %v460, %v461
    %v463 = vrot.slane %v462, 2
    %v464 = vmax.f32 %v462, %v463
    %v465 = vrot.slane %v464, 1
    %v466 = vmax.f32 %v464, %v465
    %v467 = vmax.f32 %v436, %v437
    %v468 = vrot.slane %v467, 4
    %v469 = vmax.f32 %v467, %v468
    %v470 = vrot.slane %v469, 2
    %v471 = vmax.f32 %v469, %v470
    %v472 = vrot.slane %v471, 1
    %v473 = vmax.f32 %v471, %v472
    %v474 = vmax.f32 %v438, %v439
    %v475 = vrot.slane %v474, 4
    %v476 = vmax.f32 %v474, %v475
    %v477 = vrot.slane %v476, 2
    %v478 = vmax.f32 %v476, %v477
    %v479 = vrot.slane %v478, 1
    %v480 = vmax.f32 %v478, %v479
    %v481 = vmax.f32 %v440, %v441
    %v482 = vrot.slane %v481, 4
    %v483 = vmax.f32 %v481, %v482
    %v484 = vrot.slane %v483, 2
    %v485 = vmax.f32 %v483, %v484
    %v486 = vrot.slane %v485, 1
    %v487 = vmax.f32 %v485, %v486
    %v488 = vmax.f32 %v442, %v443
    %v489 = vrot.slane %v488, 4
    %v490 = vmax.f32 %v488, %v489
    %v491 = vrot.slane %v490, 2
    %v492 = vmax.f32 %v490, %v491
    %v493 = vrot.slane %v492, 1
    %v494 = vmax.f32 %v492, %v493
    %v495 = vmax.f32 %v444, %v445
    %v496 = vrot.slane %v495, 4
    %v497 = vmax.f32 %v495, %v496
    %v498 = vrot.slane %v497, 2
    %v499 = vmax.f32 %v497, %v498
    %v500 = vrot.slane %v499, 1
    %v501 = vmax.f32 %v499, %v500
    %v502 = vpack.c.bf16 %v452, %v452
    %v503 = vpack.c.bf16 %v459, %v459
    %v504 = vpack.c.bf16 %v466, %v466
    %v505 = vpack.c.bf16 %v473, %v473
    %v506 = vpack.c.bf16 %v480, %v480
    %v507 = vpack.c.bf16 %v487, %v487
    %v508 = vpack.c.bf16 %v494, %v494
    %v509 = vpack.c.bf16 %v501, %v501
    %v510 = vld [vmem:[#allocation7] sm:$0xf]
    %v511 = vld [vmem:[#allocation7 + $0x4] sm:$0xf]
    %v512 = vld [vmem:[#allocation7 + $0x8] sm:$0xf]
    %v513 = vld [vmem:[#allocation7 + $0xc] sm:$0xf]
    %v514 = vld [vmem:[#allocation7 + $0x10] sm:$0xf]
    %v515 = vld [vmem:[#allocation7 + $0x14] sm:$0xf]
    %v516 = vld [vmem:[#allocation7 + $0x18] sm:$0xf]
    %v517 = vld [vmem:[#allocation7 + $0x1c] sm:$0xf]
    %v518 = vld [vmem:[#allocation7 + $0x20] sm:$0xf]
    %v519 = vld [vmem:[#allocation7 + $0x24] sm:$0xf]
    %v520 = vld [vmem:[#allocation7 + $0x28] sm:$0xf]
    %v521 = vld [vmem:[#allocation7 + $0x2c] sm:$0xf]
    %v522 = vld [vmem:[#allocation7 + $0x30] sm:$0xf]
    %v523 = vld [vmem:[#allocation7 + $0x34] sm:$0xf]
    %v524 = vld [vmem:[#allocation7 + $0x38] sm:$0xf]
    %v525 = vld [vmem:[#allocation7 + $0x3c] sm:$0xf]
    %v526 = vld [vmem:[%s5] sm:$0x1]
    %v528 = vlaneseq
    %v529 = vshrl.u32 %v528, 7
    %v530 = vsub.s32 0, %v529
    %v531 = vrot.slane %v526, %v530
    %v541 = vunpack.c.l.b16 %v502
    %v542 = vunpack.c.l.b16 %v503
    %v543 = vunpack.c.l.b16 %v504
    %v544 = vunpack.c.l.b16 %v505
    %v545 = vunpack.c.l.b16 %v506
    %v546 = vunpack.c.l.b16 %v507
    %v547 = vunpack.c.l.b16 %v508
    %v548 = vunpack.c.l.b16 %v509
    %vm549 = vcmask 1041409
    %v550 = vsel %vm549, %v542, %v541
    %vm551 = vcmask 1042434
    %v552 = vsel %vm551, %v543, %v550
    %vm553 = vcmask 1043459
    %v554 = vsel %vm553, %v544, %v552
    %vm555 = vcmask 1044484
    %v556 = vsel %vm555, %v545, %v554
    %vm557 = vcmask 1045509
    %v558 = vsel %vm557, %v546, %v556
    %vm559 = vcmask 1046534
    %v560 = vsel %vm559, %v547, %v558
    %vm561 = vcmask 1047559
    %v562 = vsel %vm561, %v548, %v560
    %v563 = vpack.c.b16 %v562, %v562
    %v581 = vunpack.c.l.b16 %v510
    %v582 = vunpack.c.l.b16 %v511
    %v583 = vunpack.c.l.b16 %v512
    %v584 = vunpack.c.l.b16 %v513
    %v585 = vunpack.c.l.b16 %v514
    %v586 = vunpack.c.l.b16 %v515
    %v587 = vunpack.c.l.b16 %v516
    %v588 = vunpack.c.l.b16 %v517
    %v589 = vunpack.c.l.b16 %v518
    %v590 = vunpack.c.l.b16 %v519
    %v591 = vunpack.c.l.b16 %v520
    %v592 = vunpack.c.l.b16 %v521
    %v593 = vunpack.c.l.b16 %v522
    %v594 = vunpack.c.l.b16 %v523
    %v595 = vunpack.c.l.b16 %v524
    %v596 = vunpack.c.l.b16 %v525
    %v597 = vpack.c.b16 %v582, %v581
    %v598 = vpack.c.b16 %v584, %v583
    %v599 = vpack.c.b16 %v586, %v585
    %v600 = vpack.c.b16 %v588, %v587
    %v601 = vpack.c.b16 %v590, %v589
    %v602 = vpack.c.b16 %v592, %v591
    %v603 = vpack.c.b16 %v594, %v593
    %v604 = vpack.c.b16 %v596, %v595
    %613 = vmatprep.subr.bf16.mxu0 0
    %614 = vmatpush1.bf16.msra.mxu0 %v597
    %615 = vmatprep.subr.bf16.mxu0 0
    %616 = vmatpush1.bf16.msra.mxu0 %v598
    %617 = vmatprep.subr.bf16.mxu0 0
    %618 = vmatpush1.bf16.msra.mxu0 %v599
    %619 = vmatprep.subr.bf16.mxu0 0
    %620 = vmatpush1.bf16.msra.mxu0 %v600
    %621 = vmatprep.subr.bf16.mxu0 0
    %622 = vmatpush1.bf16.msra.mxu0 %v601
    %623 = vmatprep.subr.bf16.mxu0 0
    %624 = vmatpush1.bf16.msra.mxu0 %v602
    %625 = vmatprep.subr.bf16.mxu0 0
    %626 = vmatpush1.bf16.msra.mxu0 %v603
    %627 = vmatprep.subr.bf16.mxu0 0
    %628 = vmatpush1.bf16.msra.mxu0 %v604
    %629 = vmatprep.subr.bf16.mxu0 0
    %630 = vmatpush1.bf16.msra.mxu0 0
    %631 = vmatprep.subr.bf16.mxu0 0
    %632 = vmatpush1.bf16.msra.mxu0 0
    %633 = vmatprep.subr.bf16.mxu0 0
    %634 = vmatpush1.bf16.msra.mxu0 0
    %635 = vmatprep.subr.bf16.mxu0 0
    %636 = vmatpush1.bf16.msra.mxu0 0
    %637 = vmatprep.subr.bf16.mxu0 0
    %638 = vmatpush1.bf16.msra.mxu0 0
    %639 = vmatprep.subr.bf16.mxu0 0
    %640 = vmatpush1.bf16.msra.mxu0 0
    %641 = vmatprep.subr.bf16.mxu0 0
    %642 = vmatpush1.bf16.msra.mxu0 0
    %643 = vmatprep.subr.bf16.mxu0 0
    %644 = vmatpush1.bf16.msra.mxu0 0
    %645 = vmatprep.mubr.bf16.mxu0 0
    %646 = vmatmul.mubr.bf16.gmra.mrb[0].mxu0 %v563
    %v647 = vpop.f32.mrb[0].mxu0
    %v648 = vadd.f32 %v531, %v647
    %v649 = vpop.f32.mrb[0].mxu0
    %v650 = vpop.f32.mrb[0].mxu0
    %v651 = vpop.f32.mrb[0].mxu0
    %652 = vdwg.mxu0
    %653 = vst [vmem:[#allocation8] sm:$0xff] %v648
    // Predicated region
    $region38: #{tpu_custom_call.1} parent=1 // pred_check
      _
    $region39: #{tpu_custom_call.1} parent=1 // pred_check_branch
      %655 = sbr.rel (0) target = $region41
    $region40: #{tpu_custom_call.1} parent=1 // pred_region
      %s657 = ssub.s32 128, 128
      %658 = vsyncadd [#allocation4], %s657
      %s660 = sshll.u32 [#allocation8], 4
      %s661 = int_to_ptr.vmem [resolvable:$true] %s660
      %663 = dma.vmem_to_hbm [thread:$0]  %s661, 128, %s6, [#allocation4]
    $region41: #{tpu_custom_call.1} parent=1 // pred_fallthru
      _
    // Predicated region
    $region42: #{tpu_custom_call.1} parent=1 // pred_check
      _
    $region43: #{tpu_custom_call.1} parent=1 // pred_check_branch
      %665 = sbr.rel (0) target = $region45
    $region44: #{tpu_custom_call.1} parent=1 // pred_region
      %666 = dma.done [#allocation4], 128
    $region45: #{tpu_custom_call.1} parent=1 // pred_fallthru
      _
    %667 = vsyncpa [#allocation3], 1
    %668 = vsyncpa [#allocation6], 1
    %669 = vsyncpa [#allocation4], 1

</llo_original>
